<compile_context>
chip_gen: v6e
topology: v6e:2x2x1
jax: 0.10.0
libtpu: 0.0.40
codegen_flags: <defaults>
</compile_context>

<pallas_src>
import functools
import math

import jax
import jax.numpy as jnp
from jax.experimental import pallas as pl
from jax.experimental.pallas import tpu as pltpu

DTYPE = jnp.bfloat16            # mirrors `self.dtype = torch.bfloat16`
_GELU_C = 0.7978845608028654    # sqrt(2/pi)
_VMEM_LIMIT = 48 * 1024 * 1024  # explicit budget: fits v7x 64 MiB/TC physical


def _pick_tile(dim, candidates):
    """Largest candidate tile that evenly divides `dim`, else the full dim."""
    for c in candidates:
        if dim % c == 0:
            return c
    return dim


def _pick_tile_with_offset(dim, offset, candidates):
    """Largest candidate dividing both `dim` and `offset` (row-offset tiling)."""
    for c in candidates:
        if dim % c == 0 and offset % c == 0:
            return c
    return math.gcd(dim, offset) if offset else dim


def _gelu_f32(y):
    return 0.5 * y * (1.0 + jnp.tanh(_GELU_C * (y + 0.044715 * (y * y * y))))


# --------------------------------------------------------------------------
# Kernel 1: silu(x) @ W + b      (AdaLayerNormZero modulation projection)
# --------------------------------------------------------------------------

def _silu_matmul_kernel(x_ref, w_ref, b_ref, o_ref):
    x = x_ref[...].astype(jnp.float32)
    x = (x * jax.nn.sigmoid(x)).astype(jnp.bfloat16)         # silu in f32, bf16 to MXU
    y = jnp.dot(x, w_ref[...], preferred_element_type=jnp.float32)
    y = y + b_ref[...].astype(jnp.float32)
    o_ref[...] = y.astype(o_ref.dtype)


def silu_linear(x, w, b):
    """x: (M, K) -> silu(x) @ w + b, tiled over N."""
    M, K = x.shape
    N = w.shape[1]
    tn = _pick_tile(N, (512, 256, 128))
    return pl.pallas_call(
        _silu_matmul_kernel,
        out_shape=jax.ShapeDtypeStruct((M, N), x.dtype),
        grid=(N // tn,),
        in_specs=[
            pl.BlockSpec((M, K), lambda n: (0, 0)),
            pl.BlockSpec((K, tn), lambda n: (0, n)),
            pl.BlockSpec((1, tn), lambda n: (0, n)),
        ],
        out_specs=pl.BlockSpec((M, tn), lambda n: (0, n)),
        compiler_params=pltpu.CompilerParams(
            dimension_semantics=("parallel",),
            vmem_limit_bytes=_VMEM_LIMIT),
    )(x, w, b.reshape(1, N))


# --------------------------------------------------------------------------
# Kernel 2: LayerNorm + AdaLN modulate (cached) + matmul (+ column-gated GELU)
# --------------------------------------------------------------------------

def _ln_mod_matmul_kernel(x_ref, shift_ref, scale_ref, w_ref, b_ref, o_ref,
                          xm_ref, *, gelu_start, eps):
    n = pl.program_id(2)

    # LayerNorm + modulation computed once per (b, s) tile, reused across n.
    @pl.when(n == 0)
    def _():
        x = x_ref[...].astype(jnp.float32)                    # (ts, K)
        mu = jnp.mean(x, axis=-1, keepdims=True)
        var = jnp.mean(jnp.square(x - mu), axis=-1, keepdims=True)
        xn = (x - mu) * jax.lax.rsqrt(var + eps)              # LayerNorm, no affine
        shift = shift_ref[...].astype(jnp.float32)            # (1, K)
        scale = scale_ref[...].astype(jnp.float32)
        xm_ref[...] = (xn * (1.0 + scale) + shift).astype(jnp.bfloat16)

    y = jnp.dot(xm_ref[...], w_ref[...], preferred_element_type=jnp.float32)
    y = y + b_ref[...].astype(jnp.float32)

    if gelu_start is None:
        o_ref[...] = y.astype(o_ref.dtype)
    elif gelu_start == 0:
        o_ref[...] = _gelu_f32(y).astype(o_ref.dtype)
    else:
        tn = o_ref.shape[-1]
        col0 = n * tn

        @pl.when(col0 + tn <= gelu_start)          # tile entirely before GELU cols
        def _():
            o_ref[...] = y.astype(o_ref.dtype)

        @pl.when(col0 + tn > gelu_start)           # tile (partly) in GELU cols
        def _():
            col = col0 + jax.lax.broadcasted_iota(jnp.int32, y.shape, 1)
            o_ref[...] = jnp.where(col >= gelu_start, _gelu_f32(y), y
                                   ).astype(o_ref.dtype)


def ln_mod_linear(x, shift, scale, w, b, gelu_start=None):
    """x: (B, S, K); shift/scale: (B, K); w: (K, N) -> (B, S, N).
    GELU is applied to output columns >= gelu_start (None = never, 0 = all)."""
    B, S, K = x.shape
    N = w.shape[1]
    ts = _pick_tile(S, (1024, 512, 256, 128))
    tn = _pick_tile(N, (512, 256, 128))
    return pl.pallas_call(
        functools.partial(_ln_mod_matmul_kernel, gelu_start=gelu_start, eps=1e-6),
        out_shape=jax.ShapeDtypeStruct((B, S, N), x.dtype),
        grid=(B, S // ts, N // tn),
        in_specs=[
            pl.BlockSpec((None, ts, K), lambda b_, s, n: (b_, s, 0)),
            pl.BlockSpec((None, 1, K), lambda b_, s, n: (b_, 0, 0)),
            pl.BlockSpec((None, 1, K), lambda b_, s, n: (b_, 0, 0)),
            pl.BlockSpec((K, tn), lambda b_, s, n: (0, n)),
            pl.BlockSpec((1, tn), lambda b_, s, n: (0, n)),
        ],
        out_specs=pl.BlockSpec((None, ts, tn), lambda b_, s, n: (b_, s, n)),
        scratch_shapes=[pltpu.VMEM((ts, K), jnp.bfloat16)],
        compiler_params=pltpu.CompilerParams(
            dimension_semantics=("parallel", "parallel", "arbitrary"),
            vmem_limit_bytes=_VMEM_LIMIT),
    )(x, shift.reshape(B, 1, K), scale.reshape(B, 1, K), w, b.reshape(1, N))


# --------------------------------------------------------------------------
# Kernel 3: K-tiled matmul + bias, fused with gated residual add (in-place)
#           out = residual + gate * (x @ W + b)
# Shared by the 3-D activation path and the per-head attention-output path.
# --------------------------------------------------------------------------

def _matmul_gate_res_kernel(x_ref, w_ref, b_ref, g_ref, r_ref, o_ref, acc_ref):
    kk = pl.program_id(3)

    @pl.when(kk == 0)
    def _():
        acc_ref[...] = jnp.zeros_like(acc_ref)

    acc_ref[...] += jnp.dot(x_ref[...], w_ref[...],
                            preferred_element_type=jnp.float32)

    @pl.when(kk == pl.num_programs(3) - 1)
    def _():
        y = acc_ref[...] + b_ref[...].astype(jnp.float32)
        o_ref[...] = (r_ref[...].astype(jnp.float32)
                      + g_ref[...].astype(jnp.float32) * y).astype(o_ref.dtype)


def matmul_gate_res(x, w, b, gate, residual):
    """x: (B,S,K); w: (K,N); gate: (B,N); residual: (B,S,N) -> (B,S,N)."""
    B, S, K = x.shape
    N = w.shape[1]
    ts = _pick_tile(S, (1024, 512, 256, 128))
    tn = _pick_tile(N, (512, 256, 128))
    tk = _pick_tile(K, (1024, 512, 256))
    return pl.pallas_call(
        _matmul_gate_res_kernel,
        out_shape=jax.ShapeDtypeStruct((B, S, N), residual.dtype),
        grid=(B, S // ts, N // tn, K // tk),
        in_specs=[
            pl.BlockSpec((None, ts, tk), lambda b_, s, n, k: (b_, s, k)),
            pl.BlockSpec((tk, tn), lambda b_, s, n, k: (k, n)),
            pl.BlockSpec((1, tn), lambda b_, s, n, k: (0, n)),
            pl.BlockSpec((None, 1, tn), lambda b_, s, n, k: (b_, 0, n)),
            pl.BlockSpec((None, ts, tn), lambda b_, s, n, k: (b_, s, n)),
        ],
        out_specs=pl.BlockSpec((None, ts, tn), lambda b_, s, n, k: (b_, s, n)),
        scratch_shapes=[pltpu.VMEM((ts, tn), jnp.float32)],
        input_output_aliases={4: 0},   # accumulate into the residual buffer
        compiler_params=pltpu.CompilerParams(
            dimension_semantics=("parallel", "parallel", "parallel", "arbitrary"),
            vmem_limit_bytes=_VMEM_LIMIT),
    )(x, w, b.reshape(1, N), gate.reshape(B, 1, N), residual)


def matmul_heads_gate_res(attn, w, b, gate, residual, s_offset=0):
    """attn: (B,H,S_attn,D) consumed at row offset `s_offset`; w: (H*D, N);
    gate: (B,N); residual: (B,S,N).  Head axis is the K-reduction grid axis,
    so no merge_heads transpose is needed."""
    B, H, S_attn, D = attn.shape
    _, S, N = residual.shape
    ts = _pick_tile_with_offset(S, s_offset, (1024, 512, 256, 128))
    tn = _pick_tile(N, (512, 256, 128))
    off_blk = s_offset // ts
    return pl.pallas_call(
        _matmul_gate_res_kernel,
        out_shape=jax.ShapeDtypeStruct((B, S, N), residual.dtype),
        grid=(B, S // ts, N // tn, H),
        in_specs=[
            pl.BlockSpec((None, None, ts, D),
                         lambda b_, s, n, k: (b_, k, s + off_blk, 0)),
            pl.BlockSpec((D, tn), lambda b_, s, n, k: (k, n)),
            pl.BlockSpec((1, tn), lambda b_, s, n, k: (0, n)),
            pl.BlockSpec((None, 1, tn), lambda b_, s, n, k: (b_, 0, n)),
            pl.BlockSpec((None, ts, tn), lambda b_, s, n, k: (b_, s, n)),
        ],
        out_specs=pl.BlockSpec((None, ts, tn), lambda b_, s, n, k: (b_, s, n)),
        scratch_shapes=[pltpu.VMEM((ts, tn), jnp.float32)],
        input_output_aliases={4: 0},
        compiler_params=pltpu.CompilerParams(
            dimension_semantics=("parallel", "parallel", "parallel", "arbitrary"),
            vmem_limit_bytes=_VMEM_LIMIT),
    )(attn, w, b.reshape(1, N), gate.reshape(B, 1, N), residual)


# --------------------------------------------------------------------------
# Kernel 4: RMS qk-norm + rotate-half RoPE (gammas & softmax scale folded
#           into the per-position cos/sin tables) - one pass over q and k.
# --------------------------------------------------------------------------

def _qk_norm_rope_kernel(q_ref, k_ref, cq_ref, sq_ref, ck_ref, sk_ref,
                         qo_ref, ko_ref, *, eps):
    def nr(x, c, s):
        xf = x.astype(jnp.float32)                           # (H, ts, D)
        ms = jnp.mean(xf * xf, axis=-1, keepdims=True)
        xn = xf * jax.lax.rsqrt(ms + eps)                    # gamma lives in c/s
        half = xn.shape[-1] // 2
        xr = jnp.concatenate([-xn[..., half:], xn[..., :half]], axis=-1)
        return (xn * c[None, :, :] + xr * s[None, :, :]).astype(jnp.bfloat16)

    qo_ref[...] = nr(q_ref[...], cq_ref[...], sq_ref[...])
    ko_ref[...] = nr(k_ref[...], ck_ref[...], sk_ref[...])


def qk_norm_rope(q, k, cos_q, sin_q, cos_k, sin_k):
    """q/k: (B, H, S, D) bf16; tables: (S, D) f32 -> normed+roped q, k."""
    B, H, S, D = q.shape
    ts = _pick_tile(S, (256, 128))
    qkspec = lambda: pl.BlockSpec((None, H, ts, D), lambda b_, s: (b_, 0, s, 0))
    tbl = lambda: pl.BlockSpec((ts, D), lambda b_, s: (s, 0))
    return pl.pallas_call(
        functools.partial(_qk_norm_rope_kernel, eps=1e-6),
        out_shape=(jax.ShapeDtypeStruct((B, H, S, D), jnp.bfloat16),
                   jax.ShapeDtypeStruct((B, H, S, D), jnp.bfloat16)),
        grid=(B, S // ts),
        in_specs=[qkspec(), qkspec(), tbl(), tbl(), tbl(), tbl()],
        out_specs=(qkspec(), qkspec()),
        compiler_params=pltpu.CompilerParams(
            dimension_semantics=("parallel", "parallel"),
            vmem_limit_bytes=_VMEM_LIMIT),
    )(q, k, cos_q, sin_q, cos_k, sin_k)


# --------------------------------------------------------------------------
# Kernel 5: pure flash-style attention (q/k already normed, roped, scaled)
# --------------------------------------------------------------------------

def _flash_kernel(q_ref, k_ref, v_ref, o_ref, m_sc, l_sc, acc_sc):
    ki = pl.program_id(3)

    @pl.when(ki == 0)
    def _():
        m_sc[...] = jnp.full_like(m_sc, -1e30)
        l_sc[...] = jnp.zeros_like(l_sc)
        acc_sc[...] = jnp.zeros_like(acc_sc)

    q = q_ref[...]                                          # (tq, D) bf16
    k = k_ref[...]                                          # (tk, D) bf16
    v = v_ref[...]                                          # (tk, D) bf16
    s = jax.lax.dot_general(q, k, (((1,), (1,)), ((), ())),
                            preferred_element_type=jnp.float32)   # (tq, tk)
    m_prev = m_sc[...]                                      # (tq,128) lane-replicated
    m_new = jnp.maximum(m_prev, jnp.max(s, axis=-1, keepdims=True))
    alpha = jnp.exp(m_prev - m_new)
    p = jnp.exp(s - m_new[:, :1])
    l_sc[...] = alpha * l_sc[...] + jnp.sum(p, axis=-1, keepdims=True)
    acc_sc[...] = alpha[:, :1] * acc_sc[...] + jnp.dot(
        p.astype(jnp.bfloat16), v, preferred_element_type=jnp.float32)
    m_sc[...] = m_new

    @pl.when(ki == pl.num_programs(3) - 1)
    def _():
        o_ref[...] = (acc_sc[...]
                      * pl.reciprocal(l_sc[:, :1], approx=True)).astype(o_ref.dtype)


def attention(q, k, v):
    """q/k/v: (B, H, S, D) bf16 -> (B, H, S, D) bf16."""
    B, H, S, D = q.shape
    tq = _pick_tile(S, (512, 256, 128))
    tkv = _pick_tile(S, (256, 128))
    return pl.pallas_call(
        _flash_kernel,
        out_shape=jax.ShapeDtypeStruct((B, H, S, D), q.dtype),
        grid=(B, H, S // tq, S // tkv),
        in_specs=[
            pl.BlockSpec((None, None, tq, D), lambda b_, h, qi, ki: (b_, h, qi, 0)),
            pl.BlockSpec((None, None, tkv, D), lambda b_, h, qi, ki: (b_, h, ki, 0)),
            pl.BlockSpec((None, None, tkv, D), lambda b_, h, qi, ki: (b_, h, ki, 0)),
        ],
        out_specs=pl.BlockSpec((None, None, tq, D),
                               lambda b_, h, qi, ki: (b_, h, qi, 0)),
        scratch_shapes=[pltpu.VMEM((tq, 128), jnp.float32),
                        pltpu.VMEM((tq, 128), jnp.float32),
                        pltpu.VMEM((tq, D), jnp.float32)],
        compiler_params=pltpu.CompilerParams(
            dimension_semantics=("parallel", "parallel", "parallel", "arbitrary"),
            vmem_limit_bytes=_VMEM_LIMIT),
    )(q, k, v)


# --------------------------------------------------------------------------
# Wrapper-level helpers
# --------------------------------------------------------------------------

def rope_tables(rot):
    """rot: (1, S, D/2, 1, 2) fp32 -> rotate-half (cos, sin) tables, each (S, D).
    (The C++ pack_rotemb/pad_tensor path is a pure layout permutation of the
    same cos/sin data, so it is intentionally not materialized.)"""
    cos = rot[0, :, :, 0, 0]
    sin = rot[0, :, :, 0, 1]
    return (jnp.concatenate([cos, cos], axis=-1),
            jnp.concatenate([sin, sin], axis=-1))


def fold_qk_tables(cos, sin, gq_pos, gk_pos, head_dim):
    """Fold per-position qk-norm gammas and the 1/sqrt(D) softmax scale into
    the rotate-half RoPE tables (sin picks the gamma of the rotated channel)."""
    half = head_dim // 2
    scale = 1.0 / math.sqrt(head_dim)
    gq_rot = jnp.roll(gq_pos, -half, axis=-1)
    gk_rot = jnp.roll(gk_pos, -half, axis=-1)
    return (cos * gq_pos * scale, sin * gq_rot * scale,
            cos * gk_pos, sin * gk_rot)


def to_heads(qkv, heads):
    """(B, S, 3C) -> q, k, v each (B, H, S, D) via one XLA transpose."""
    B, S, C3 = qkv.shape
    D = C3 // (3 * heads)
    x = qkv.reshape(B, S, 3, heads, D).transpose(2, 0, 3, 1, 4)
    return x[0], x[1], x[2]


# --------------------------------------------------------------------------
# OminiFlux transformer blocks
# --------------------------------------------------------------------------

def joint_block(p, img, txt, cond, temb, cond_temb, cos_cat, sin_cat,
                S_txt, S_img, S_cond):
    dim, heads, head_dim = p["_dims"]
    B = img.shape[0]

    # AdaLayerNormZero modulation (img & cond share weights; one fused matmul)
    emb_ic = silu_linear(jnp.concatenate([temb, cond_temb], axis=0),
                         p["jn1_w"], p["jn1_b"])              # (2B, 6C)
    emb_t = silu_linear(temb, p["jn1c_w"], p["jn1c_b"])       # (B, 6C)
    sh_i, sc_i, g_i, shm_i, scm_i, gm_i = jnp.split(emb_ic[:B], 6, axis=-1)
    sh_c, sc_c, g_c, shm_c, scm_c, gm_c = jnp.split(emb_ic[B:], 6, axis=-1)
    sh_t, sc_t, g_t, shm_t, scm_t, gm_t = jnp.split(emb_t, 6, axis=-1)

    # Fused LayerNorm + modulate + QKV projection (one matmul per stream)
    qkv_t = ln_mod_linear(txt, sh_t, sc_t, p["jc_qkv_w"], p["jc_qkv_b"])
    qkv_i = ln_mod_linear(img, sh_i, sc_i, p["j_qkv_w"], p["j_qkv_b"])
    qkv_c = ln_mod_linear(cond, sh_c, sc_c, p["j_qkv_w"], p["j_qkv_b"])

    qkv = jnp.concatenate([qkv_t, qkv_i, qkv_c], axis=1)      # [txt | img | cond]
    q, k, v = to_heads(qkv, heads)

    # per-position gammas for segments [txt | img | cond], folded into tables
    gq_pos = jnp.concatenate([
        jnp.broadcast_to(p["jc_gq"][None, :], (S_txt, head_dim)),
        jnp.broadcast_to(p["j_gq"][None, :], (S_img + S_cond, head_dim))], axis=0)
    gk_pos = jnp.concatenate([
        jnp.broadcast_to(p["jc_gk"][None, :], (S_txt, head_dim)),
        jnp.broadcast_to(p["j_gk"][None, :], (S_img + S_cond, head_dim))], axis=0)
    cq, sq, ck, sk = fold_qk_tables(cos_cat, sin_cat, gq_pos, gk_pos, head_dim)

    qn, kn = qk_norm_rope(q, k, cq, sq, ck, sk)
    o = attention(qn, kn, v)                                  # (B, H, S_tot, D)

    # attention out-projection + gated residual, consuming o per-head/offset
    txt = matmul_heads_gate_res(o, p["j_addout_w"], p["j_addout_b"], g_t, txt, 0)
    img = matmul_heads_gate_res(o, p["j_out_w"], p["j_out_b"], g_i, img, S_txt)
    cond = matmul_heads_gate_res(o, p["j_out_w"], p["j_out_b"], g_c, cond,
                                 S_txt + S_img)

    # feed-forward: LN+mod+FF1(gelu) fused, then FF2 fused with gate+residual
    img = matmul_gate_res(
        ln_mod_linear(img, shm_i, scm_i, p["j_ff1_w"], p["j_ff1_b"], gelu_start=0),
        p["j_ff2_w"], p["j_ff2_b"], gm_i, img)
    cond = matmul_gate_res(
        ln_mod_linear(cond, shm_c, scm_c, p["j_ff1_w"], p["j_ff1_b"], gelu_start=0),
        p["j_ff2_w"], p["j_ff2_b"], gm_c, cond)
    txt = matmul_gate_res(
        ln_mod_linear(txt, shm_t, scm_t, p["j_ffc1_w"], p["j_ffc1_b"], gelu_start=0),
        p["j_ffc2_w"], p["j_ffc2_b"], gm_t, txt)
    return img, txt, cond


def single_block(p, x, cond, temb, cond_temb, cos_cat, sin_cat):
    dim, heads, head_dim = p["_dims"]
    B, Sx, C = x.shape
    Sc = cond.shape[1]

    emb = silu_linear(jnp.concatenate([temb, cond_temb], axis=0),
                      p["s_norm_w"], p["s_norm_b"])           # (2B, 3C)
    sh_x, sc_x, g_x = jnp.split(emb[:B], 3, axis=-1)
    sh_c, sc_c, g_c = jnp.split(emb[B:], 3, axis=-1)

    # Fused LN + modulate + [QKV | MLP-in] projection; GELU applied exactly
    # once, column-gated to the MLP columns (>= 3C).
    pm_x = ln_mod_linear(x, sh_x, sc_x, p["s_qkvm_w"], p["s_qkvm_b"],
                         gelu_start=3 * C)
    pm_c = ln_mod_linear(cond, sh_c, sc_c, p["s_qkvm_w"], p["s_qkvm_b"],
                         gelu_start=3 * C)

    qkv = jnp.concatenate([pm_x[..., :3 * C], pm_c[..., :3 * C]], axis=1)
    mlp_x = pm_x[..., 3 * C:]           # already GELU'd
    mlp_c = pm_c[..., 3 * C:]

    q, k, v = to_heads(qkv, heads)
    gq_pos = jnp.broadcast_to(p["s_gq"][None, :], (Sx + Sc, head_dim))
    gk_pos = jnp.broadcast_to(p["s_gk"][None, :], (Sx + Sc, head_dim))
    cq, sq, ck, sk = fold_qk_tables(cos_cat, sin_cat, gq_pos, gk_pos, head_dim)

    qn, kn = qk_norm_rope(q, k, cq, sq, ck, sk)
    o = attention(qn, kn, v)

    # out = residual + gate*(attn@Wa + gelu(mlp)@Wm + b), gate distributed over
    # two K-tiled, in-place accumulating projections (no un-tiled dual matmul).
    zero_b = jnp.zeros((C,), DTYPE)
    x = matmul_heads_gate_res(o, p["s_out_attn_w"], zero_b, g_x, x, 0)
    x = matmul_gate_res(mlp_x, p["s_out_mlp_w"], p["s_out_b"], g_x, x)
    cond = matmul_heads_gate_res(o, p["s_out_attn_w"], zero_b, g_c, cond, Sx)
    cond = matmul_gate_res(mlp_c, p["s_out_mlp_w"], p["s_out_b"], g_c, cond)
    return x, cond


# --------------------------------------------------------------------------
# Top-level forward (mirrors NunchakuOminiFluxTransformerBlocks.forward)
# --------------------------------------------------------------------------

def omini_flux_forward(params, hidden_states, cond_hidden_states, temb, cond_temb,
                       encoder_hidden_states, image_rotary_emb, cond_rotary_emb):
    txt_tokens = encoder_hidden_states.shape[1]
    img_tokens = hidden_states.shape[1]
    cond_tokens = cond_hidden_states.shape[1]
    original_dtype = hidden_states.dtype

    img = hidden_states.astype(DTYPE)
    cond = cond_hidden_states.astype(DTYPE)
    txt = encoder_hidden_states.astype(DTYPE)
    temb = temb.astype(DTYPE)
    cond_temb = cond_temb.astype(DTYPE)

    assert image_rotary_emb.ndim == 6
    assert image_rotary_emb.shape[0] == 1
    assert image_rotary_emb.shape[1] == 1
    assert image_rotary_emb.shape[2] == txt_tokens + img_tokens

    rot_ti = image_rotary_emb.reshape(
        1, txt_tokens + img_tokens, *image_rotary_emb.shape[3:])
    rot_c = cond_rotary_emb.reshape(1, cond_tokens, *cond_rotary_emb.shape[3:])

    cos_ti, sin_ti = rope_tables(rot_ti)            # covers [txt | img]
    cos_c, sin_c = rope_tables(rot_c)
    cos_cat = jnp.concatenate([cos_ti, cos_c], axis=0)   # [txt | img | cond]
    sin_cat = jnp.concatenate([sin_ti, sin_c], axis=0)

    img, txt, cond = joint_block(params, img, txt, cond, temb, cond_temb,
                                 cos_cat, sin_cat,
                                 txt_tokens, img_tokens, cond_tokens)
    x = jnp.concatenate([txt, img], axis=1)         # txt tokens first, as in Flux
    x, cond = single_block(params, x, cond, temb, cond_temb, cos_cat, sin_cat)

    out = x.astype(original_dtype)
    # TODO(synk): controlnet residual injection and the PuLID residual callback
    # (id_embeddings) are host-side hooks into the opaque C++ model; not modeled.
    return out[:, :txt_tokens], out[:, txt_tokens:]


# --------------------------------------------------------------------------
# Deterministic synthetic parameters + load-time fusion/permutation
# --------------------------------------------------------------------------

def init_raw_params(key, dim=32, heads=4, head_dim=8, mlp_ratio=4):
    assert dim == heads * head_dim
    mlp_dim = dim * mlp_ratio
    shapes = {
        "jn1_w": (dim, 6 * dim), "jn1_b": (6 * dim,),
        "jn1c_w": (dim, 6 * dim), "jn1c_b": (6 * dim,),
        "j_q_w": (dim, dim), "j_q_b": (dim,),
        "j_k_w": (dim, dim), "j_k_b": (dim,),
        "j_v_w": (dim, dim), "j_v_b": (dim,),
        "j_addq_w": (dim, dim), "j_addq_b": (dim,),
        "j_addk_w": (dim, dim), "j_addk_b": (dim,),
        "j_addv_w": (dim, dim), "j_addv_b": (dim,),
        "j_out_w": (dim, dim), "j_out_b": (dim,),
        "j_addout_w": (dim, dim), "j_addout_b": (dim,),
        "j_ff1_w": (dim, mlp_dim), "j_ff1_b": (mlp_dim,),
        "j_ff2_w": (mlp_dim, dim), "j_ff2_b": (dim,),
        "j_ffc1_w": (dim, mlp_dim), "j_ffc1_b": (mlp_dim,),
        "j_ffc2_w": (mlp_dim, dim), "j_ffc2_b": (dim,),
        "s_norm_w": (dim, 3 * dim), "s_norm_b": (3 * dim,),
        "s_q_w": (dim, dim), "s_q_b": (dim,),
        "s_k_w": (dim, dim), "s_k_b": (dim,),
        "s_v_w": (dim, dim), "s_v_b": (dim,),
        "s_mlp_w": (dim, mlp_dim), "s_mlp_b": (mlp_dim,),
        "s_out_w": (dim + mlp_dim, dim), "s_out_b": (dim,),
    }
    raw = {}
    keys = jax.random.split(key, len(shapes))
    for (name, shape), k in zip(shapes.items(), keys):
        raw[name] = (jax.random.normal(k, shape, jnp.float32) * 0.02).astype(DTYPE)
    for name in ["j_normq", "j_normk", "j_addnormq", "j_addnormk",
                 "s_normq", "s_normk"]:
        raw[name] = jnp.ones((head_dim,), DTYPE)
    return raw


def prepare_params(raw, dim, heads, head_dim):
    """One-time load-side fusion: concat QKV(+MLP-in) weights and fold the
    interleaved->rotate-half RoPE permutation into the Q/K columns + gammas."""
    D = head_dim
    perm = jnp.concatenate([jnp.arange(0, D, 2), jnp.arange(1, D, 2)])
    col_perm = (jnp.arange(heads)[:, None] * D + perm[None, :]).reshape(-1)

    def pcols(w, b):
        return w[:, col_perm], b[col_perm]

    p = {}
    wq, bq = pcols(raw["j_q_w"], raw["j_q_b"])
    wk, bk = pcols(raw["j_k_w"], raw["j_k_b"])
    p["j_qkv_w"] = jnp.concatenate([wq, wk, raw["j_v_w"]], axis=1)
    p["j_qkv_b"] = jnp.concatenate([bq, bk, raw["j_v_b"]], axis=0)

    wq, bq = pcols(raw["j_addq_w"], raw["j_addq_b"])
    wk, bk = pcols(raw["j_addk_w"], raw["j_addk_b"])
    p["jc_qkv_w"] = jnp.concatenate([wq, wk, raw["j_addv_w"]], axis=1)
    p["jc_qkv_b"] = jnp.concatenate([bq, bk, raw["j_addv_b"]], axis=0)

    wq, bq = pcols(raw["s_q_w"], raw["s_q_b"])
    wk, bk = pcols(raw["s_k_w"], raw["s_k_b"])
    p["s_qkvm_w"] = jnp.concatenate([wq, wk, raw["s_v_w"], raw["s_mlp_w"]], axis=1)
    p["s_qkvm_b"] = jnp.concatenate([bq, bk, raw["s_v_b"], raw["s_mlp_b"]], axis=0)

    p["s_out_attn_w"] = raw["s_out_w"][:dim]
    p["s_out_mlp_w"] = raw["s_out_w"][dim:]
    p["s_out_b"] = raw["s_out_b"]

    p["j_gq"] = raw["j_normq"][perm].astype(jnp.float32)
    p["j_gk"] = raw["j_normk"][perm].astype(jnp.float32)
    p["jc_gq"] = raw["j_addnormq"][perm].astype(jnp.float32)
    p["jc_gk"] = raw["j_addnormk"][perm].astype(jnp.float32)
    p["s_gq"] = raw["s_normq"][perm].astype(jnp.float32)
    p["s_gk"] = raw["s_normk"][perm].astype(jnp.float32)

    for name in ["jn1_w", "jn1_b", "jn1c_w", "jn1c_b",
                 "j_out_w", "j_out_b", "j_addout_w", "j_addout_b",
                 "j_ff1_w", "j_ff1_b", "j_ff2_w", "j_ff2_b",
                 "j_ffc1_w", "j_ffc1_b", "j_ffc2_w", "j_ffc2_b",
                 "s_norm_w", "s_norm_b"]:
        p[name] = raw[name]
    p["_dims"] = (dim, heads, head_dim)
    return p


# --------------------------------------------------------------------------
# Main
# --------------------------------------------------------------------------

if __name__ == "__main__":
    dim, heads, head_dim = 32, 4, 8
    B, txt_tokens, img_tokens, cond_tokens = 2, 8, 16, 8

    key = jax.random.PRNGKey(0)
    k_param, k1, k2, k3, k4, k5 = jax.random.split(key, 6)
    raw = init_raw_params(k_param, dim=dim, heads=heads, head_dim=head_dim)
    params = prepare_params(raw, dim, heads, head_dim)

    hidden_states = jax.random.normal(k1, (B, img_tokens, dim), jnp.float32)
    cond_hidden_states = jax.random.normal(k2, (B, cond_tokens, dim), jnp.float32)
    encoder_hidden_states = jax.random.normal(k3, (B, txt_tokens, dim), jnp.float32)
    temb = jax.random.normal(k4, (B, dim), jnp.float32)
    cond_temb = jax.random.normal(k5, (B, dim), jnp.float32)

    def make_rotemb(n_tokens, D):
        pos = jnp.arange(n_tokens, dtype=jnp.float32)
        freqs = 1.0 / (10000.0 ** (jnp.arange(D // 2, dtype=jnp.float32) / (D // 2)))
        ang = pos[:, None] * freqs[None, :]                      # (S, D/2)
        cs = jnp.stack([jnp.cos(ang), jnp.sin(ang)], axis=-1)    # (S, D/2, 2)
        return cs.reshape(1, 1, n_tokens, D // 2, 1, 2).astype(jnp.float32)

    image_rotary_emb = make_rotemb(txt_tokens + img_tokens, head_dim)
    cond_rotary_emb = make_rotemb(cond_tokens, head_dim)

    enc_out, hid_out = omini_flux_forward(
        params, hidden_states, cond_hidden_states, temb, cond_temb,
        encoder_hidden_states, image_rotary_emb, cond_rotary_emb)
    jax.block_until_ready((enc_out, hid_out))

    assert enc_out.shape == (B, txt_tokens, dim)
    assert hid_out.shape == (B, img_tokens, dim)
    assert enc_out.dtype == jnp.float32 and hid_out.dtype == jnp.float32
    assert bool(jnp.all(jnp.isfinite(enc_out))) and bool(jnp.all(jnp.isfinite(hid_out)))
    print("KERNEL_OK")
</pallas_src>

<mosaic_0001>
module attributes {stable_mosaic.version = 11 : i64} {
  func.func @_silu_matmul_kernel(%arg0: i32, %arg1: memref<4x32xbf16, #tpu.memory_space<vmem>>, %arg2: memref<32x192xbf16, #tpu.memory_space<vmem>>, %arg3: memref<1x192xbf16, #tpu.memory_space<vmem>>, %arg4: memref<4x192xbf16, #tpu.memory_space<vmem>>) attributes {dimension_semantics = [#tpu.dimension_semantics<parallel>], iteration_bounds = array<i64: 1>, scalar_prefetch = 0 : i64, scratch_operands = 0 : i64, tpu.core_type = #tpu.core_type<tc>, window_params = [{pipeline_mode = #tpu.pipeline_mode<synchronous>, transform_indices = @transform_0, window_bounds = array<i64: 4, 32>}, {transform_indices = @transform_1, window_bounds = array<i64: 32, 192>}, {transform_indices = @transform_2, window_bounds = array<i64: 1, 192>}, {transform_indices = @transform_3, window_bounds = array<i64: 4, 192>}]} {
    %c0 = arith.constant 0 : index
    %c0_0 = arith.constant 0 : index
    %0 = vector.load %arg1[%c0, %c0_0] : memref<4x32xbf16, #tpu.memory_space<vmem>>, vector<4x32xbf16>
    %1 = arith.extf %0 : vector<4x32xbf16> to vector<4x32xf32>
    %2 = arith.negf %1 : vector<4x32xf32>
    %3 = math.exp %2 : vector<4x32xf32>
    %cst = arith.constant 1.000000e+00 : f32
    %4 = vector.broadcast %cst : f32 to vector<4x32xf32>
    %5 = arith.addf %4, %3 : vector<4x32xf32>
    %6 = arith.divf %4, %5 : vector<4x32xf32>
    %7 = arith.mulf %1, %6 : vector<4x32xf32>
    %8 = arith.truncf %7 : vector<4x32xf32> to vector<4x32xbf16>
    %c0_1 = arith.constant 0 : index
    %c0_2 = arith.constant 0 : index
    %9 = vector.load %arg2[%c0_1, %c0_2] : memref<32x192xbf16, #tpu.memory_space<vmem>>, vector<32x192xbf16>
    %cst_3 = arith.constant dense<0.000000e+00> : vector<4x192xf32>
    %10 = tpu.matmul %8, %9, %cst_3 {dimension_numbers = #tpu.dot_dimension_numbers<[1], [0], [0], [1], [0, 0, 1, 1], [], []>} : vector<4x32xbf16>, vector<32x192xbf16>, vector<4x192xf32> -> vector<4x192xf32>
    %c0_4 = arith.constant 0 : index
    %c0_5 = arith.constant 0 : index
    %11 = vector.load %arg3[%c0_4, %c0_5] : memref<1x192xbf16, #tpu.memory_space<vmem>>, vector<1x192xbf16>
    %12 = arith.extf %11 : vector<1x192xbf16> to vector<1x192xf32>
    %13 = vector.broadcast %12 : vector<1x192xf32> to vector<4x192xf32>
    %14 = arith.addf %10, %13 : vector<4x192xf32>
    %15 = arith.truncf %14 : vector<4x192xf32> to vector<4x192xbf16>
    %c0_6 = arith.constant 0 : index
    %c0_7 = arith.constant 0 : index
    %16 = vector.load %arg4[%c0_6, %c0_7] : memref<4x192xbf16, #tpu.memory_space<vmem>>, vector<4x192xbf16>
    tpu.vector_store %arg4[%c0_6, %c0_7], %15 {strides = array<i32>} : memref<4x192xbf16, #tpu.memory_space<vmem>>, vector<4x192xbf16>,
    return
  }
  func.func @transform_0(%arg0: i32) -> (i32, i32) {
    %c0_i32 = arith.constant 0 : i32
    %c0_i32_0 = arith.constant 0 : i32
    %c0_i32_1 = arith.constant 0 : i32
    return %c0_i32, %c0_i32_0 : i32, i32
  }
  func.func @transform_1(%arg0: i32) -> (i32, i32) {
    %c0_i32 = arith.constant 0 : i32
    %c0_i32_0 = arith.constant 0 : i32
    return %c0_i32, %arg0 : i32, i32
  }
  func.func @transform_2(%arg0: i32) -> (i32, i32) {
    %c0_i32 = arith.constant 0 : i32
    %c0_i32_0 = arith.constant 0 : i32
    return %c0_i32, %arg0 : i32, i32
  }
  func.func @transform_3(%arg0: i32) -> (i32, i32) {
    %c0_i32 = arith.constant 0 : i32
    %c0_i32_0 = arith.constant 0 : i32
    return %c0_i32, %arg0 : i32, i32
  }
}

</mosaic_0001>

<llo_original>
// kernel: tpu_custom_call.1
$region0: #{tpu_custom_call.1}
  #allocation0 [shape = 'u32[]', space=smem, size = 0x4, offset = 0x4, fixed_abs, tag = 'smem constant byte address 0x4 - core index']
  #allocation1 [shape = 'u32[144,128]{1,0:T(1,128)}', space=vmem, size = 0x12000, scoped, tag = 'internal scratch']
  %s0 = inlined_call_operand.hbm [shape: bf16[4,32], index: 0, kind: input, shape index: {}]
  %s1 = inlined_call_operand.hbm [shape: bf16[32,192], index: 1, kind: input, shape index: {}]
  %s2 = inlined_call_operand.vmem [shape: bf16[1,192], index: 2, kind: input, shape index: {}]
  %s3 = inlined_call_operand.hbm [shape: bf16[4,192], index: 3, kind: output, shape index: {}]
  %s4 = sld [smem:[#allocation0]]
  $region30: #{tpu_custom_call.1} parent=0
    _
  %s6 = ssub.s32 1, %s4
  %s7 = scalar_select 0, %s6, %s4
  $region1: #{tpu_custom_call.1} parent=0
    #allocation2 [shape = 'u8[1024]{0}', space=vmem, size = 0x400, scoped, tag = 'input window, operand 0, single buffered']
    #allocation3 [shape = 's32[1]{0}', space=sflag, size = 0x4, scoped, tag = 'scoped memory for tpu_custom_call.1']
    #allocation4 [shape = 's32[1]{0}', space=sflag, size = 0x4, scoped, tag = 'scoped memory for tpu_custom_call.1']
    #allocation5 [shape = 'u8[16384]{0}', space=vmem, size = 0x4000, scoped, tag = 'input window, operand 1, single buffered']
    #allocation6 [shape = 's32[1]{0}', space=sflag, size = 0x4, scoped, tag = 'scoped memory for tpu_custom_call.1']
    #allocation7 [shape = 'u8[2048]{0}', space=vmem, size = 0x800, scoped, tag = 'output window, operand 0, single buffered']
    %8 = vsyncpa [#allocation3], 0
    %9 = vsyncpa [#allocation6], 0
    %10 = vsyncpa [#allocation4], 0
    // Predicated region
    $region2: #{tpu_custom_call.1} parent=1 // pred_check
      _
    $region3: #{tpu_custom_call.1} parent=1 // pred_check_branch
      %12 = sbr.rel (0) target = $region5
    $region4: #{tpu_custom_call.1} parent=1 // pred_region
      %s14 = ssub.s32 32, 32
      %15 = vsyncadd [#allocation3], %s14
      %s17 = sshll.u32 [#allocation2], 4
      %s18 = int_to_ptr.vmem [resolvable:$true] %s17
      %20 = dma.hbm_to_vmem [thread:$0]  %s0, 32, %s18, [#allocation3]
    $region5: #{tpu_custom_call.1} parent=1 // pred_fallthru
      _
    // Predicated region
    $region6: #{tpu_custom_call.1} parent=1 // pred_check
      _
    $region7: #{tpu_custom_call.1} parent=1 // pred_check_branch
      %22 = sbr.rel (0) target = $region9
    $region8: #{tpu_custom_call.1} parent=1 // pred_region
      %s24 = ssub.s32 512, 512
      %25 = vsyncadd [#allocation6], %s24
      %s26 = sshll.u32 [#allocation5], 4
      %s27 = int_to_ptr.vmem [resolvable:$true] %s26
      %32 = dma.hbm_to_vmem [thread:$0]  %s1, 512, %s27, [#allocation6], 128, 128, 8
    $region9: #{tpu_custom_call.1} parent=1 // pred_fallthru
      _
    // Predicated region
    $region10: #{tpu_custom_call.1} parent=1 // pred_check
      _
    $region11: #{tpu_custom_call.1} parent=1 // pred_check_branch
      %34 = sbr.rel (0) target = $region13
    $region12: #{tpu_custom_call.1} parent=1 // pred_region
      _
    $region13: #{tpu_custom_call.1} parent=1 // pred_fallthru
      _
    // Predicated region
    $region14: #{tpu_custom_call.1} parent=1 // pred_check
      _
    $region15: #{tpu_custom_call.1} parent=1 // pred_check_branch
      %36 = sbr.rel (0) target = $region17
    $region16: #{tpu_custom_call.1} parent=1 // pred_region
      %37 = dma.done [#allocation3], 32
    $region17: #{tpu_custom_call.1} parent=1 // pred_fallthru
      _
    // Predicated region
    $region18: #{tpu_custom_call.1} parent=1 // pred_check
      _
    $region19: #{tpu_custom_call.1} parent=1 // pred_check_branch
      %39 = sbr.rel (0) target = $region21
    $region20: #{tpu_custom_call.1} parent=1 // pred_region
      %40 = dma.done [#allocation6], 512
    $region21: #{tpu_custom_call.1} parent=1 // pred_fallthru
      _
    %v42 = vld [vmem:[#allocation2] sm:$0x3]
    %v43 = vunpack.c.l.bf16 %v42
    %v44 = vxor.u32 %v43, 2147483648
    %v45 = vmul.f32 %v44, 1.442695
    %v46 = vpow.pop %v45
    %v47 = vadd.f32 %v46, 1.0
    %v48 = vrcp.pop %v47
    %v49 = vmul.f32 1.0, %v48
    %v50 = vmul.f32 %v43, %v49
    %v51 = vpack.c.bf16 %v50, %v50
    %v52 = vld [vmem:[#allocation5] sm:$0xff]
    %v53 = vld [vmem:[#allocation5 + $0x8] sm:$0xff]
    %v54 = vld [vmem:[#allocation5 + $0x10] sm:$0xff]
    %v55 = vld [vmem:[#allocation5 + $0x18] sm:$0xff]
    %v56 = vld [vmem:[%s2] sm:$0x3]
    %v57 = vunpack.c.l.bf16 %v56
    %v59 = vlaneseq
    %v60 = vshrl.u32 %v59, 7
    %v61 = vsub.s32 0, %v60
    %v62 = vrot.slane %v57, %v61
    %v63 = vlaneseq
    %v64 = vshrl.u32 %v63, 7
    %v65 = vsub.s32 2, %v64
    %v66 = vrot.slane %v57, %v65
    %v69 = vlaneseq
    %v70 = vshrl.u32 %v69, 7
    %v71 = vsub.s32 0, %v70
    %v72 = vrot.slane %v62, %v71
    %v73 = vlaneseq
    %v74 = vshrl.u32 %v73, 7
    %v75 = vsub.s32 0, %v74
    %v76 = vrot.slane %v66, %v75
    %v81 = vunpack.c.l.b16 %v52
    %v82 = vunpack.c.h.b16 %v52
    %v83 = vunpack.c.l.b16 %v53
    %v84 = vunpack.c.h.b16 %v53
    %v85 = vunpack.c.l.b16 %v54
    %v86 = vunpack.c.h.b16 %v54
    %v87 = vunpack.c.l.b16 %v55
    %v88 = vunpack.c.h.b16 %v55
    %v89 = vpack.c.b16 %v83, %v81
    %v90 = vpack.c.b16 %v84, %v82
    %v91 = vpack.c.b16 %v87, %v85
    %v92 = vpack.c.b16 %v88, %v86
    %vm97 = vcmask 261120
    %v99 = vsel %vm97, %v51, 0
    %101 = vmatprep.subr.bf16.mxu0 0
    %102 = vmatpush1.bf16.msra.mxu0 0
    %103 = vmatprep.subr.bf16.mxu0 0
    %104 = vmatpush1.bf16.msra.mxu0 0
    %105 = vmatprep.subr.bf16.mxu0 0
    %106 = vmatpush1.bf16.msra.mxu0 0
    %107 = vmatprep.subr.bf16.mxu0 0
    %108 = vmatpush1.bf16.msra.mxu0 0
    %109 = vmatprep.subr.bf16.mxu0 0
    %110 = vmatpush1.bf16.msra.mxu0 0
    %111 = vmatprep.subr.bf16.mxu0 0
    %112 = vmatpush1.bf16.msra.mxu0 0
    %113 = vmatprep.subr.bf16.mxu0 %v92
    %114 = vmatpush1.bf16.msra.mxu0 %v91
    %115 = vmatprep.subr.bf16.mxu0 %v90
    %116 = vmatpush1.bf16.msra.mxu0 %v89
    %117 = vmatprep.subr.bf16.mxu0 0
    %118 = vmatpush2.bf16.msra.mxu0 0
    %119 = vmatprep.subr.bf16.mxu0 0
    %120 = vmatpush2.bf16.msra.mxu0 0
    %121 = vmatprep.subr.bf16.mxu0 0
    %122 = vmatpush2.bf16.msra.mxu0 0
    %123 = vmatprep.subr.bf16.mxu0 0
    %124 = vmatpush2.bf16.msra.mxu0 0
    %125 = vmatprep.subr.bf16.mxu0 0
    %126 = vmatpush2.bf16.msra.mxu0 0
    %127 = vmatprep.subr.bf16.mxu0 0
    %128 = vmatpush2.bf16.msra.mxu0 0
    %129 = vmatprep.subr.bf16.mxu0 0
    %130 = vmatpush2.bf16.msra.mxu0 0
    %131 = vmatprep.subr.bf16.mxu0 0
    %132 = vmatpush2.bf16.msra.mxu0 0
    %133 = vmatprep.mubr.bf16.mxu0 0
    %134 = vmatmul.mubr.bf16.gmra.mxu0 %v99
    %v135 = vpop.f32.mrf.mxu0
    %v136 = vadd.f32 %v72, %v135
    %v137 = vpop.f32.mrf.mxu0
    %v138 = vadd.f32 %v76, %v137
    %v139 = vpop.f32.mrf.mxu0
    %v140 = vpop.f32.mrf.mxu0
    %141 = vdwg.mxu0
    %v142 = vpack.c.bf16 %v136, %v136
    %v143 = vpack.c.bf16 %v138, %v138
    %v146 = vcombine.low %v142, %v143
    %v148 = vunpack.c.l.s4 1983009808
    %v149 = vunpack.c.0.s8 %v148
    %v150 = vlaneseq
    %v151 = vshrl.u32 %v150, 7
    %v152 = vsub.s32 %v149, %v151
    %v153 = vrot.slane %v146, %v152
    %vm155 = vcmask 1041408
    %vm156 = vcmask 519170
    %vm157 = vmor %vm156, %vm155
    %158 = vst.msk [vmem:[#allocation7] sm:$0xf] %vm157, %v153
    // Predicated region
    $region22: #{tpu_custom_call.1} parent=1 // pred_check
      _
    $region23: #{tpu_custom_call.1} parent=1 // pred_check_branch
      %160 = sbr.rel (0) target = $region25
    $region24: #{tpu_custom_call.1} parent=1 // pred_region
      %s162 = ssub.s32 64, 64
      %163 = vsyncadd [#allocation4], %s162
      %s165 = sshll.u32 [#allocation7], 4
      %s166 = int_to_ptr.vmem [resolvable:$true] %s165
      %168 = dma.vmem_to_hbm [thread:$0]  %s166, 64, %s3, [#allocation4]
    $region25: #{tpu_custom_call.1} parent=1 // pred_fallthru
      _
    // Predicated region
    $region26: #{tpu_custom_call.1} parent=1 // pred_check
      _
    $region27: #{tpu_custom_call.1} parent=1 // pred_check_branch
      %170 = sbr.rel (0) target = $region29
    $region28: #{tpu_custom_call.1} parent=1 // pred_region
      %171 = dma.done [#allocation4], 64
    $region29: #{tpu_custom_call.1} parent=1 // pred_fallthru
      _
    %172 = vsyncpa [#allocation3], 1
    %173 = vsyncpa [#allocation6], 1
    %174 = vsyncpa [#allocation4], 1

</llo_original>
